<compile_context>
chip_gen: v5e
topology: v5e:2x2
jax: 0.10.0
libtpu: 0.0.40
codegen_flags: <defaults>
</compile_context>

<pallas_src>
import jax
import jax.numpy as jnp
from jax.experimental import pallas as pl
from jax.experimental.pallas import tpu as pltpu


def _round_up(x, m):
    return -(-x // m) * m


def _vardrop_kernel(x_ref, m_ref, o_ref):
    # (rows, lanes) tile * (rows, 1) per-row mask -> lane-broadcast multiply
    # in x.dtype on the VPU.
    o_ref[...] = x_ref[...] * m_ref[...]


def variational_dropout_2d(x, dropout=0.5, *, seed=0, training=True):
    """Forward pass of _VariationalDropoutNd (2-D mask: shape (N, C, 1, 1))."""
    if dropout < 0.0 or dropout > 1.0:
        raise ValueError(
            "dropout probability has to be between 0 and 1, but got {}".format(dropout)
        )
    if (not training) or dropout == 0.0:
        return x
    keep_prob = 1.0 - dropout

    N, C, H, W = x.shape
    NC, HW = N * C, H * W
    x2 = x.reshape(NC, HW)  # rows = (batch, channel), lanes = flattened spatial

    # One Bernoulli(keep_prob)/keep_prob value per (n, c) row, shared spatially.
    # Note: dropout == 1.0 gives 0/0 -> NaN, matching PyTorch's bernoulli_(0)/0.
    key = jax.random.PRNGKey(seed)
    keep = jax.random.bernoulli(key, p=keep_prob, shape=(NC, 1))
    mask = (keep.astype(jnp.float32) / jnp.float32(keep_prob)).astype(x.dtype)
    # TODO(synk): PyTorch caches self.mask across forward calls until reset_mask();
    # here the mask is (deterministically) regenerated per call from `seed`.

    # Adaptive, lane-dense tiles targeting ~4 MiB per block so per-grid-step
    # overhead is amortized; ragged edges handled by Pallas (no pad / slice).
    bytes_per_elem = jnp.dtype(x.dtype).itemsize
    target_elems = (4 * 1024 * 1024) // max(bytes_per_elem, 1)  # ~4 MiB / block
    LANE_BLOCK = min(_round_up(HW, 128), 2048)
    rows_fit = max(8, (target_elems // LANE_BLOCK) // 8 * 8)
    ROW_BLOCK = min(_round_up(NC, 8), min(rows_fit, 1024))
    grid = (pl.cdiv(NC, ROW_BLOCK), pl.cdiv(HW, LANE_BLOCK))

    out = pl.pallas_call(
        _vardrop_kernel,
        out_shape=jax.ShapeDtypeStruct((NC, HW), x.dtype),
        grid=grid,
        in_specs=[
            pl.BlockSpec((ROW_BLOCK, LANE_BLOCK), lambda i, j: (i, j)),
            pl.BlockSpec((ROW_BLOCK, 1), lambda i, j: (i, 0)),
        ],
        out_specs=pl.BlockSpec((ROW_BLOCK, LANE_BLOCK), lambda i, j: (i, j)),
        compiler_params=pltpu.CompilerParams(
            dimension_semantics=("parallel", "parallel"),
            vmem_limit_bytes=32 * 1024 * 1024,
        ),
    )(x2, mask)

    return out.reshape(N, C, H, W)


if __name__ == "__main__":
    key = jax.random.PRNGKey(0)
    x = jax.random.normal(key, (2, 4, 16, 16), dtype=jnp.float32)

    # training mode: mask applied
    y = jax.block_until_ready(variational_dropout_2d(x, dropout=0.5, seed=0, training=True))
    assert y.shape == x.shape and y.dtype == x.dtype

    # sanity: mask constant over spatial dims for each (n, c), value in {0, 1/(1-p)}
    ratio = (y / x).reshape(2 * 4, -1)
    row_const = jnp.max(ratio, axis=1) - jnp.min(ratio, axis=1)
    assert bool(jnp.all(row_const < 1e-5)), "mask not constant across spatial dims"
    vals = ratio[:, 0]
    assert bool(jnp.all(jnp.minimum(jnp.abs(vals), jnp.abs(vals - 2.0)) < 1e-5)), (
        "mask values not in {0, 1/(1-p)}"
    )

    # eval mode / p == 0: identity passthrough
    y_eval = jax.block_until_ready(variational_dropout_2d(x, dropout=0.5, training=False))
    assert bool(jnp.all(y_eval == x))
    y_p0 = jax.block_until_ready(variational_dropout_2d(x, dropout=0.0, training=True))
    assert bool(jnp.all(y_p0 == x))

    print("KERNEL_OK")
</pallas_src>

<mosaic_0001>
module attributes {stable_mosaic.version = 11 : i64} {
  func.func @_vardrop_kernel(%arg0: i32, %arg1: i32, %arg2: memref<8x256xf32, #tpu.memory_space<vmem>>, %arg3: memref<8x1xf32, #tpu.memory_space<vmem>>, %arg4: memref<8x256xf32, #tpu.memory_space<vmem>>) attributes {dimension_semantics = [#tpu.dimension_semantics<parallel>, #tpu.dimension_semantics<parallel>], iteration_bounds = array<i64: 1, 1>, scalar_prefetch = 0 : i64, scratch_operands = 0 : i64, tpu.core_type = #tpu.core_type<tc>, window_params = [{transform_indices = @transform_0, window_bounds = array<i64: 8, 256>}, {transform_indices = @transform_1, window_bounds = array<i64: 8, 1>}, {transform_indices = @transform_2, window_bounds = array<i64: 8, 256>}]} {
    %c0 = arith.constant 0 : index
    %c0_0 = arith.constant 0 : index
    %0 = vector.load %arg2[%c0, %c0_0] : memref<8x256xf32, #tpu.memory_space<vmem>>, vector<8x256xf32>
    %c0_1 = arith.constant 0 : index
    %c0_2 = arith.constant 0 : index
    %1 = vector.load %arg3[%c0_1, %c0_2] : memref<8x1xf32, #tpu.memory_space<vmem>>, vector<8x1xf32>
    %2 = vector.broadcast %1 : vector<8x1xf32> to vector<8x256xf32>
    %3 = arith.mulf %0, %2 : vector<8x256xf32>
    %c0_3 = arith.constant 0 : index
    %c0_4 = arith.constant 0 : index
    %4 = vector.load %arg4[%c0_3, %c0_4] : memref<8x256xf32, #tpu.memory_space<vmem>>, vector<8x256xf32>
    tpu.vector_store %arg4[%c0_3, %c0_4], %3 {strides = array<i32>} : memref<8x256xf32, #tpu.memory_space<vmem>>, vector<8x256xf32>,
    return
  }
  func.func @transform_0(%arg0: i32, %arg1: i32) -> (i32, i32) {
    %c0_i32 = arith.constant 0 : i32
    return %arg0, %arg1 : i32, i32
  }
  func.func @transform_1(%arg0: i32, %arg1: i32) -> (i32, i32) {
    %c0_i32 = arith.constant 0 : i32
    %c0_i32_0 = arith.constant 0 : i32
    return %arg0, %c0_i32 : i32, i32
  }
  func.func @transform_2(%arg0: i32, %arg1: i32) -> (i32, i32) {
    %c0_i32 = arith.constant 0 : i32
    return %arg0, %arg1 : i32, i32
  }
}

</mosaic_0001>

<llo_original>
// kernel: tpu_custom_call.1
$region0: #{tpu_custom_call.1}
  #allocation0 [shape = 'u32[]', space=smem, size = 0x4, offset = 0x4, fixed_abs, tag = 'smem constant byte address 0x4 - core index']
  #allocation1 [shape = 'u32[72,128]{1,0:T(1,128)}', space=vmem, size = 0x9000, scoped, tag = 'internal scratch']
  %s0 = inlined_call_operand.hbm [shape: f32[8,256], index: 0, kind: input, shape index: {}]
  %s1 = inlined_call_operand.vmem [shape: f32[8,1], index: 1, kind: input, shape index: {}]
  %s2 = inlined_call_operand.hbm [shape: f32[8,256], index: 2, kind: output, shape index: {}]
  %s3 = sld [smem:[#allocation0]]
  $region22: #{tpu_custom_call.1} parent=0
    _
  %s5 = ssub.s32 1, %s3
  %s6 = scalar_select 0, %s5, %s3
  $region1: #{tpu_custom_call.1} parent=0
    #allocation2 [shape = 'u8[8192]{0}', space=vmem, size = 0x2000, scoped, tag = 'input window, operand 0, single buffered']
    #allocation3 [shape = 's32[1]{0}', space=sflag, size = 0x4, scoped, tag = 'scoped memory for tpu_custom_call.1']
    #allocation4 [shape = 's32[1]{0}', space=sflag, size = 0x4, scoped, tag = 'scoped memory for tpu_custom_call.1']
    #allocation5 [shape = 'u8[8192]{0}', space=vmem, size = 0x2000, scoped, tag = 'output window, operand 0, single buffered']
    %7 = vsyncpa [#allocation3], 0
    %8 = vsyncpa [#allocation4], 0
    // Predicated region
    $region2: #{tpu_custom_call.1} parent=1 // pred_check
      _
    $region3: #{tpu_custom_call.1} parent=1 // pred_check_branch
      %10 = sbr.rel (0) target = $region5
    $region4: #{tpu_custom_call.1} parent=1 // pred_region
      %12 = vsyncadd [#allocation3], 0
      %s14 = sshll.u32 %s0, 4
      %s15 = int_to_ptr.hbm [resolvable:$true] %s14
      %s16 = sshll.u32 [#allocation2], 4
      %s17 = int_to_ptr.vmem [resolvable:$true] %s16
      %19 = dma.hbm_to_vmem [thread:$0]  %s15, 256, %s17, [#allocation3]
    $region5: #{tpu_custom_call.1} parent=1 // pred_fallthru
      _
    // Predicated region
    $region6: #{tpu_custom_call.1} parent=1 // pred_check
      _
    $region7: #{tpu_custom_call.1} parent=1 // pred_check_branch
      %21 = sbr.rel (0) target = $region9
    $region8: #{tpu_custom_call.1} parent=1 // pred_region
      _
    $region9: #{tpu_custom_call.1} parent=1 // pred_fallthru
      _
    // Predicated region
    $region10: #{tpu_custom_call.1} parent=1 // pred_check
      _
    $region11: #{tpu_custom_call.1} parent=1 // pred_check_branch
      %23 = sbr.rel (0) target = $region13
    $region12: #{tpu_custom_call.1} parent=1 // pred_region
      %25 = dma.done [#allocation3], 256
    $region13: #{tpu_custom_call.1} parent=1 // pred_fallthru
      _
    %v26 = vld [vmem:[#allocation2] sm:$0xff]
    %v27 = vld [vmem:[#allocation2 + $0x8] sm:$0xff]
    %v28 = vld [vmem:[%s1] sm:$0xff]
    %30 = vset.pattern.permute.xlu0 0
    %31 = vperm.xlu0 %30, %v28
    %v32 = vpop.permute.xlu0 %31
    %v34 = vmul.f32 %v26, %v32
    %v35 = vmul.f32 %v27, %v32
    %36 = vst [vmem:[#allocation5] sm:$0xff] %v34
    %37 = vst [vmem:[#allocation5 + $0x8] sm:$0xff] %v35
    // Predicated region
    $region14: #{tpu_custom_call.1} parent=1 // pred_check
      _
    $region15: #{tpu_custom_call.1} parent=1 // pred_check_branch
      %39 = sbr.rel (0) target = $region17
    $region16: #{tpu_custom_call.1} parent=1 // pred_region
      %41 = vsyncadd [#allocation4], 0
      %s43 = sshll.u32 [#allocation5], 4
      %s44 = int_to_ptr.vmem [resolvable:$true] %s43
      %s45 = sshll.u32 %s2, 4
      %s46 = int_to_ptr.hbm [resolvable:$true] %s45
      %48 = dma.vmem_to_hbm [thread:$0]  %s44, 256, %s46, [#allocation4]
    $region17: #{tpu_custom_call.1} parent=1 // pred_fallthru
      _
    // Predicated region
    $region18: #{tpu_custom_call.1} parent=1 // pred_check
      _
    $region19: #{tpu_custom_call.1} parent=1 // pred_check_branch
      %50 = sbr.rel (0) target = $region21
    $region20: #{tpu_custom_call.1} parent=1 // pred_region
      %52 = dma.done [#allocation4], 256
    $region21: #{tpu_custom_call.1} parent=1 // pred_fallthru
      _
    %53 = vsyncpa [#allocation3], 1
    %54 = vsyncpa [#allocation4], 1

</llo_original>
